<compile_context>
chip_gen: v6e
topology: v6e:2x2x1
jax: 0.10.0
libtpu: 0.0.40
codegen_flags: <defaults>
</compile_context>

<pallas_src>
import jax
import jax.numpy as jnp
from jax.experimental import pallas as pl
from jax.experimental.pallas import tpu as pltpu


# --------------------------------------------------------------------------
# Kernels
# --------------------------------------------------------------------------
def _affine_relu_kernel(x_ref, s_ref, b_ref, o_ref):
    # x: (tm, C), s/b: (1, C)
    x = x_ref[...].astype(jnp.float32)
    o_ref[...] = jnp.maximum(x * s_ref[...] + b_ref[...], 0.0).astype(o_ref.dtype)


def _matmul_affine_relu_kernel(p_ref, w_ref, s_ref, b_ref, o_ref):
    # p: (tm, K), w: (K, Cout), s/b: (1, Cout)
    acc = jnp.dot(p_ref[...].astype(jnp.float32), w_ref[...].astype(jnp.float32),
                  preferred_element_type=jnp.float32)
    o_ref[...] = jnp.maximum(acc * s_ref[...] + b_ref[...], 0.0).astype(o_ref.dtype)


def _dual_matmul_add_kernel(p2_ref, w2_ref, p0_ref, w0_ref, s_ref, b_ref, o_ref):
    # main conv2 + (skip conv * bn3 scale) + folded biases
    main = jnp.dot(p2_ref[...].astype(jnp.float32), w2_ref[...].astype(jnp.float32),
                   preferred_element_type=jnp.float32)
    skip = jnp.dot(p0_ref[...].astype(jnp.float32), w0_ref[...].astype(jnp.float32),
                   preferred_element_type=jnp.float32)
    o_ref[...] = (main + skip * s_ref[...] + b_ref[...]).astype(o_ref.dtype)


# --------------------------------------------------------------------------
# Pallas-call wrappers
# --------------------------------------------------------------------------
def _pick_row_tile(m, max_tile=1024):
    """Largest 8-aligned row tile dividing m; prefer >=2 grid steps."""
    if m <= max_tile:
        if m % 16 == 0 and m >= 32:
            return m // 2          # >=2 parallel grid steps for megacore
        return m                   # single full block (always legal)
    t = max_tile
    while t >= 8:
        if m % t == 0 and t % 8 == 0:
            return t
        t -= 8
    return m


def _affine_relu(x, s, b):
    m, c = x.shape
    tm = _pick_row_tile(m)
    return pl.pallas_call(
        _affine_relu_kernel,
        out_shape=jax.ShapeDtypeStruct((m, c), x.dtype),
        grid_spec=pltpu.PrefetchScalarGridSpec(
            num_scalar_prefetch=0,
            grid=(m // tm,),
            in_specs=[
                pl.BlockSpec((tm, c), lambda i: (i, 0)),
                pl.BlockSpec((1, c), lambda i: (0, 0)),
                pl.BlockSpec((1, c), lambda i: (0, 0)),
            ],
            out_specs=pl.BlockSpec((tm, c), lambda i: (i, 0)),
        ),
        compiler_params=pltpu.CompilerParams(dimension_semantics=("parallel",)),
    )(x, s.reshape(1, c), b.reshape(1, c))


def _matmul_affine_relu(p, w, s, b):
    m, k = p.shape
    n = w.shape[1]
    tm = _pick_row_tile(m)
    return pl.pallas_call(
        _matmul_affine_relu_kernel,
        out_shape=jax.ShapeDtypeStruct((m, n), p.dtype),
        grid_spec=pltpu.PrefetchScalarGridSpec(
            num_scalar_prefetch=0,
            grid=(m // tm,),
            in_specs=[
                pl.BlockSpec((tm, k), lambda i: (i, 0)),
                pl.BlockSpec((k, n), lambda i: (0, 0)),
                pl.BlockSpec((1, n), lambda i: (0, 0)),
                pl.BlockSpec((1, n), lambda i: (0, 0)),
            ],
            out_specs=pl.BlockSpec((tm, n), lambda i: (i, 0)),
        ),
        compiler_params=pltpu.CompilerParams(dimension_semantics=("parallel",)),
    )(p, w, s.reshape(1, n), b.reshape(1, n))


def _dual_matmul_add(p2, w2, p0, w0, s, b):
    m, k2 = p2.shape
    k0 = p0.shape[1]
    n = w2.shape[1]
    tm = _pick_row_tile(m)
    return pl.pallas_call(
        _dual_matmul_add_kernel,
        out_shape=jax.ShapeDtypeStruct((m, n), p2.dtype),
        grid_spec=pltpu.PrefetchScalarGridSpec(
            num_scalar_prefetch=0,
            grid=(m // tm,),
            in_specs=[
                pl.BlockSpec((tm, k2), lambda i: (i, 0)),
                pl.BlockSpec((k2, n), lambda i: (0, 0)),
                pl.BlockSpec((tm, k0), lambda i: (i, 0)),
                pl.BlockSpec((k0, n), lambda i: (0, 0)),
                pl.BlockSpec((1, n), lambda i: (0, 0)),
                pl.BlockSpec((1, n), lambda i: (0, 0)),
            ],
            out_specs=pl.BlockSpec((tm, n), lambda i: (i, 0)),
        ),
        compiler_params=pltpu.CompilerParams(dimension_semantics=("parallel",)),
    )(p2, w2, p0, w0, s.reshape(1, n), b.reshape(1, n))


# --------------------------------------------------------------------------
# Wrapper-side layout plumbing (pure data movement)
# --------------------------------------------------------------------------
def _im2col(x_nhwc, stride, padding):
    """(B,H,W,C) -> (B*Ho*Wo, 9*C) patches for a 3x3 conv."""
    b, h, w, c = x_nhwc.shape
    ho = (h + 2 * padding - 3) // stride + 1
    wo = (w + 2 * padding - 3) // stride + 1
    xp = jnp.pad(x_nhwc, ((0, 0), (padding, padding), (padding, padding), (0, 0)))
    taps = []
    for dh in range(3):
        for dw in range(3):
            taps.append(jax.lax.slice(
                xp,
                (0, dh, dw, 0),
                (b, dh + (ho - 1) * stride + 1, dw + (wo - 1) * stride + 1, c),
                (1, stride, stride, 1)))
    patches = jnp.concatenate(taps, axis=-1)            # (B, Ho, Wo, 9*C)
    return patches.reshape(b * ho * wo, 9 * c), (ho, wo)


def _reshape_w(w_oihw):
    """PyTorch (Cout,Cin,3,3) -> (9*Cin, Cout), rows ordered (tap, cin)."""
    cout, cin = w_oihw.shape[:2]
    return jnp.transpose(w_oihw, (2, 3, 1, 0)).reshape(9 * cin, cout)


def _fold_bn(gamma, beta, mean, var, eps):
    s = gamma / jnp.sqrt(var + eps)
    return s, beta - mean * s


# --------------------------------------------------------------------------
# Residual forward (Pallas)
# --------------------------------------------------------------------------
def residual_forward(x_nchw, params, *, stride=1, padding=1, eps=1e-5):
    b, cin, h, w = x_nchw.shape
    cout = params["w1"].shape[0]

    s1, b1 = _fold_bn(*params["bn1"], eps)              # applied to x      (Cin)
    s2, b2 = _fold_bn(*params["bn2"], eps)              # applied post conv1 (Cout)
    s3, b3 = _fold_bn(*params["bn3"], eps)              # applied post skip  (Cout)

    # Fold conv biases into the fused epilogues.
    b2_eff = params["c1"] * s2 + b2                     # bn2(conv1(.)+c1)
    bias_out = params["c2"] + params["c3"] * s3 + b3    # conv2 bias + bn3(skip bias)

    x_nhwc = jnp.transpose(x_nchw, (0, 2, 3, 1))        # channel-last

    # K1: u = relu(bn1(x))
    u_flat = _affine_relu(x_nhwc.reshape(b * h * w, cin), s1, b1)
    u = u_flat.reshape(b, h, w, cin)

    # K2: t = relu(bn2(conv1(u)))  (conv1: stride, padding)
    p1, (ho, wo) = _im2col(u, stride, padding)
    t_flat = _matmul_affine_relu(p1, _reshape_w(params["w1"]), s2, b2_eff)
    t = t_flat.reshape(b, ho, wo, cout)

    # K3: y = conv2(t) + bn3(conv_skip(x))  (conv2: stride 1 pad 1; skip: stride, pad 1)
    p2, _ = _im2col(t, 1, 1)
    p0, _ = _im2col(x_nhwc, stride, 1)
    y_flat = _dual_matmul_add(p2, _reshape_w(params["w2"]),
                              p0, _reshape_w(params["w3"]), s3, bias_out)

    y = y_flat.reshape(b, ho, wo, cout)
    return jnp.transpose(y, (0, 3, 1, 2))               # back to NCHW


# --------------------------------------------------------------------------
# Pure-JAX reference mirroring the PyTorch module (inference-mode BN)
# --------------------------------------------------------------------------
def _conv_ref(x, w, bias, stride, padding):
    out = jax.lax.conv_general_dilated(
        x, w, window_strides=(stride, stride),
        padding=((padding, padding), (padding, padding)),
        dimension_numbers=("NCHW", "OIHW", "NCHW"))
    return out + bias[None, :, None, None]


def _bn_ref(x, gamma, beta, mean, var, eps=1e-5):
    s = gamma / jnp.sqrt(var + eps)
    return (x - mean[None, :, None, None]) * s[None, :, None, None] \
        + beta[None, :, None, None]


def residual_ref(x, params, *, stride=1, padding=1, eps=1e-5):
    u = jnp.maximum(_bn_ref(x, *params["bn1"], eps=eps), 0.0)
    t = _conv_ref(u, params["w1"], params["c1"], stride, padding)
    t = jnp.maximum(_bn_ref(t, *params["bn2"], eps=eps), 0.0)
    main = _conv_ref(t, params["w2"], params["c2"], 1, 1)
    skip = _conv_ref(x, params["w3"], params["c3"], stride, 1)
    skip = _bn_ref(skip, *params["bn3"], eps=eps)
    return main + skip


# --------------------------------------------------------------------------
if __name__ == "__main__":
    B, Cin, Cout, H, W = 2, 4, 8, 16, 16
    stride, padding = 1, 1

    key = jax.random.PRNGKey(0)
    ks = jax.random.split(key, 20)

    def unif(k, shape, scale=1.0):
        return jax.random.uniform(k, shape, jnp.float32, -1.0, 1.0) * scale

    x = jax.random.normal(ks[0], (B, Cin, H, W), dtype=jnp.float32)

    w1 = unif(ks[1], (Cout, Cin, 3, 3), 1.0 / (9 * Cin) ** 0.5)
    c1 = unif(ks[2], (Cout,), 1.0 / (9 * Cin) ** 0.5)
    w2 = unif(ks[3], (Cout, Cout, 3, 3), 1.0 / (9 * Cout) ** 0.5)
    c2 = unif(ks[4], (Cout,), 1.0 / (9 * Cout) ** 0.5)
    w3 = unif(ks[5], (Cout, Cin, 3, 3), 1.0 / (9 * Cin) ** 0.5)
    c3 = unif(ks[6], (Cout,), 1.0 / (9 * Cin) ** 0.5)

    def bn_params(k0, k1, k2, k3, c):
        gamma = 1.0 + 0.1 * unif(k0, (c,))
        beta = 0.1 * unif(k1, (c,))
        mean = 0.1 * unif(k2, (c,))
        var = 1.0 + 0.1 * jnp.abs(unif(k3, (c,)))
        return (gamma, beta, mean, var)

    params = dict(
        w1=w1, c1=c1, w2=w2, c2=c2, w3=w3, c3=c3,
        bn1=bn_params(ks[7], ks[8], ks[9], ks[10], Cin),
        bn2=bn_params(ks[11], ks[12], ks[13], ks[14], Cout),
        bn3=bn_params(ks[15], ks[16], ks[17], ks[18], Cout),
    )

    out = jax.block_until_ready(
        residual_forward(x, params, stride=stride, padding=padding))
    ref = jax.block_until_ready(
        residual_ref(x, params, stride=stride, padding=padding))

    assert out.shape == ref.shape == (B, Cout, H, W)
    assert jnp.allclose(out, ref, atol=1e-4, rtol=1e-4), \
        float(jnp.max(jnp.abs(out - ref)))
    print("KERNEL_OK")
</pallas_src>

<mosaic_0001>
module attributes {stable_mosaic.version = 11 : i64} {
  func.func @_affine_relu_kernel(%arg0: i32, %arg1: memref<256x4xf32, #tpu.memory_space<vmem>>, %arg2: memref<1x4xf32, #tpu.memory_space<vmem>>, %arg3: memref<1x4xf32, #tpu.memory_space<vmem>>, %arg4: memref<256x4xf32, #tpu.memory_space<vmem>>) attributes {dimension_semantics = [#tpu.dimension_semantics<parallel>], iteration_bounds = array<i64: 2>, scalar_prefetch = 0 : i64, scratch_operands = 0 : i64, tpu.core_type = #tpu.core_type<tc>, window_params = [{transform_indices = @transform_0, window_bounds = array<i64: 256, 4>}, {pipeline_mode = #tpu.pipeline_mode<synchronous>, transform_indices = @transform_1, window_bounds = array<i64: 1, 4>}, {pipeline_mode = #tpu.pipeline_mode<synchronous>, transform_indices = @transform_2, window_bounds = array<i64: 1, 4>}, {transform_indices = @transform_3, window_bounds = array<i64: 256, 4>}]} {
    %c0 = arith.constant 0 : index
    %c0_0 = arith.constant 0 : index
    %0 = vector.load %arg1[%c0, %c0_0] : memref<256x4xf32, #tpu.memory_space<vmem>>, vector<256x4xf32>
    %c0_1 = arith.constant 0 : index
    %c0_2 = arith.constant 0 : index
    %1 = vector.load %arg2[%c0_1, %c0_2] : memref<1x4xf32, #tpu.memory_space<vmem>>, vector<1x4xf32>
    %2 = vector.broadcast %1 : vector<1x4xf32> to vector<256x4xf32>
    %3 = arith.mulf %0, %2 : vector<256x4xf32>
    %c0_3 = arith.constant 0 : index
    %c0_4 = arith.constant 0 : index
    %4 = vector.load %arg3[%c0_3, %c0_4] : memref<1x4xf32, #tpu.memory_space<vmem>>, vector<1x4xf32>
    %5 = vector.broadcast %4 : vector<1x4xf32> to vector<256x4xf32>
    %6 = arith.addf %3, %5 : vector<256x4xf32>
    %cst = arith.constant 0.000000e+00 : f32
    %7 = vector.broadcast %cst : f32 to vector<256x4xf32>
    %8 = arith.maximumf %6, %7 : vector<256x4xf32>
    %c0_5 = arith.constant 0 : index
    %c0_6 = arith.constant 0 : index
    %9 = vector.load %arg4[%c0_5, %c0_6] : memref<256x4xf32, #tpu.memory_space<vmem>>, vector<256x4xf32>
    tpu.vector_store %arg4[%c0_5, %c0_6], %8 {strides = array<i32>} : memref<256x4xf32, #tpu.memory_space<vmem>>, vector<256x4xf32>,
    return
  }
  func.func @transform_0(%arg0: i32) -> (i32, i32) {
    %c0_i32 = arith.constant 0 : i32
    %c0_i32_0 = arith.constant 0 : i32
    return %arg0, %c0_i32 : i32, i32
  }
  func.func @transform_1(%arg0: i32) -> (i32, i32) {
    %c0_i32 = arith.constant 0 : i32
    %c0_i32_0 = arith.constant 0 : i32
    %c0_i32_1 = arith.constant 0 : i32
    return %c0_i32, %c0_i32_0 : i32, i32
  }
  func.func @transform_2(%arg0: i32) -> (i32, i32) {
    %c0_i32 = arith.constant 0 : i32
    %c0_i32_0 = arith.constant 0 : i32
    %c0_i32_1 = arith.constant 0 : i32
    return %c0_i32, %c0_i32_0 : i32, i32
  }
  func.func @transform_3(%arg0: i32) -> (i32, i32) {
    %c0_i32 = arith.constant 0 : i32
    %c0_i32_0 = arith.constant 0 : i32
    return %arg0, %c0_i32 : i32, i32
  }
}

</mosaic_0001>

<llo_original>
// kernel: tpu_custom_call.1
$region0: #{tpu_custom_call.1}
  #allocation0 [shape = 'u32[]', space=smem, size = 0x4, offset = 0x4, fixed_abs, tag = 'smem constant byte address 0x4 - core index']
  #allocation1 [shape = 'u32[144,128]{1,0:T(1,128)}', space=vmem, size = 0x12000, scoped, tag = 'internal scratch']
  %s0 = inlined_call_operand.vmem [shape: f32[512,4], index: 0, kind: input, shape index: {}]
  %s1 = inlined_call_operand.vmem [shape: f32[1,4], index: 1, kind: input, shape index: {}]
  %s2 = inlined_call_operand.vmem [shape: f32[1,4], index: 2, kind: input, shape index: {}]
  %s3 = inlined_call_operand.vmem [shape: f32[512,4], index: 3, kind: output, shape index: {}]
  %s4 = sld [smem:[#allocation0]]
  $region45: #{tpu_custom_call.1} parent=0
    _
  %s6 = ssub.s32 1, %s4
  %s7 = scalar_select 0, %s6, %s4
  loop: start=0, step=1, limit=4
  $region2: #{tpu_custom_call.1} parent=0 // loop_pre_header
    _
  $region3: #{tpu_custom_call.1} parent=0 // loop_header
    %s9 = sphi 0, %s13
    %p10 = scmp.ge.s32.totalorder %s9, 4
    %s19 = sphi 0, %s21
    %s22 = sphi 0, %s19
    %s23 = sphi 0, %s22
    %s39 = sphi 0, %s23
    %s43 = sphi 0, %s43
    %s45 = sphi 0, %s43
    %s46 = sphi 0, %s45
    %s60 = sphi 0, %s46
    %s64 = sphi 0, %s64
    %s66 = sphi 0, %s64
    %s67 = sphi 0, %s66
    %s81 = sphi 0, %s67
    %s87 = sphi 0, %s89
    %s90 = sphi 0, %s87
    %s91 = sphi 0, %s90
    %s107 = sphi 0, %s91
  $region4: #{tpu_custom_call.1} parent=0 // loop_header_branch
    %12 = sbr.rel (%p10) target = $region8
  $region5: #{tpu_custom_call.1} parent=0 // loop_body
    %s14 = ssub.s32 %s9, 1
    %s15 = ssub.s32 %s9, 2
    %s16 = sadd.s32 %s9, 1
    %s17 = ssub.s32 %s9, %s16
    %p18 = scmp.eq.s32.totalorder %s17, 0
    %s20 = sadd.s32 %s19, 1
    %s21 = scalar_select %p18, %s19, %s20
    %p24 = pneg %p18
    %p25 = scmp.eq.s32.totalorder %s9, 1
    %p26 = por %p24, %p25
    %p27 = scmp.ne.s32.totalorder %s19, %s22
    %p28 = scmp.eq.s32.totalorder %s9, 0
    %p29 = por %p27, %p28
    %p30 = scmp.ne.s32.totalorder %s19, %s22
    %p31 = scmp.eq.s32.totalorder %s14, 1
    %p32 = por %p30, %p31
    %p33 = scmp.ne.s32.totalorder %s22, %s23
    %p34 = scmp.eq.s32.totalorder %s14, 0
    %p35 = por %p33, %p34
    %p36 = scmp.ne.s32.totalorder %s22, %s23
    %p37 = scmp.eq.s32.totalorder %s15, 1
    %p38 = por %p36, %p37
    %p40 = scmp.ne.s32.totalorder %s23, %s39
    %p41 = scmp.eq.s32.totalorder %s15, 0
    %p42 = por %p40, %p41
    %s44 = sadd.s32 %s43, 1
    %p47 = scmp.eq.s32.totalorder %s9, 1
    %p48 = scmp.ne.s32.totalorder %s43, %s45
    %p49 = scmp.eq.s32.totalorder %s9, 0
    %p50 = por %p48, %p49
    %p51 = scmp.ne.s32.totalorder %s43, %s45
    %p52 = scmp.eq.s32.totalorder %s14, 1
    %p53 = por %p51, %p52
    %p54 = scmp.ne.s32.totalorder %s45, %s46
    %p55 = scmp.eq.s32.totalorder %s14, 0
    %p56 = por %p54, %p55
    %p57 = scmp.ne.s32.totalorder %s45, %s46
    %p58 = scmp.eq.s32.totalorder %s15, 1
    %p59 = por %p57, %p58
    %p61 = scmp.ne.s32.totalorder %s46, %s60
    %p62 = scmp.eq.s32.totalorder %s15, 0
    %p63 = por %p61, %p62
    %s65 = sadd.s32 %s64, 1
    %p68 = scmp.eq.s32.totalorder %s9, 1
    %p69 = scmp.ne.s32.totalorder %s64, %s66
    %p70 = scmp.eq.s32.totalorder %s9, 0
    %p71 = por %p69, %p70
    %p72 = scmp.ne.s32.totalorder %s64, %s66
    %p73 = scmp.eq.s32.totalorder %s14, 1
    %p74 = por %p72, %p73
    %p75 = scmp.ne.s32.totalorder %s66, %s67
    %p76 = scmp.eq.s32.totalorder %s14, 0
    %p77 = por %p75, %p76
    %p78 = scmp.ne.s32.totalorder %s66, %s67
    %p79 = scmp.eq.s32.totalorder %s15, 1
    %p80 = por %p78, %p79
    %p82 = scmp.ne.s32.totalorder %s67, %s81
    %p83 = scmp.eq.s32.totalorder %s15, 0
    %p84 = por %p82, %p83
    %s85 = ssub.s32 %s9, %s16
    %p86 = scmp.eq.s32.totalorder %s85, 0
    %s88 = sadd.s32 %s87, 1
    %s89 = scalar_select %p86, %s87, %s88
    %p92 = pneg %p86
    %p93 = scmp.eq.s32.totalorder %s9, 1
    %p94 = por %p92, %p93
    %p95 = scmp.ne.s32.totalorder %s87, %s90
    %p96 = scmp.eq.s32.totalorder %s9, 0
    %p97 = por %p95, %p96
    %p98 = scmp.ne.s32.totalorder %s87, %s90
    %p99 = scmp.eq.s32.totalorder %s14, 1
    %p100 = por %p98, %p99
    %p101 = scmp.ne.s32.totalorder %s90, %s91
    %p102 = scmp.eq.s32.totalorder %s14, 0
    %p103 = por %p101, %p102
    %p104 = scmp.ne.s32.totalorder %s90, %s91
    %p105 = scmp.eq.s32.totalorder %s15, 1
    %p106 = por %p104, %p105
    %p108 = scmp.ne.s32.totalorder %s91, %s107
    %p109 = scmp.eq.s32.totalorder %s15, 0
    %p110 = por %p108, %p109
    %p111 = scmp.le.s32.totalorder 1, %s9
    %p112 = scmp.lt.s32.totalorder %s9, 3
    %p113 = pnand %p111, %p112
    %p114 = pneg %p113
    // Predicated region
    $region9: #{tpu_custom_call.1} parent=5 // pred_check
      _
    $region10: #{tpu_custom_call.1} parent=5 // pred_check_branch
      %116 = sbr.rel (%p113) target = $region12
    $region11: #{tpu_custom_call.1} parent=5 // pred_region
      %s117 = ssub.s32 %s9, 1
      // Predicated region
      $region13: #{tpu_custom_call.1} parent=11 // pred_check
        %p118 = pneg %p56
      $region14: #{tpu_custom_call.1} parent=11 // pred_check_branch
        %120 = sbr.rel (%p118) target = $region16
      $region15: #{tpu_custom_call.1} parent=11 // pred_region
        _
      $region16: #{tpu_custom_call.1} parent=11 // pred_fallthru
        _
      // Predicated region
      $region17: #{tpu_custom_call.1} parent=11 // pred_check
        %p121 = pneg %p77
      $region18: #{tpu_custom_call.1} parent=11 // pred_check_branch
        %123 = sbr.rel (%p121) target = $region20
      $region19: #{tpu_custom_call.1} parent=11 // pred_region
        _
      $region20: #{tpu_custom_call.1} parent=11 // pred_fallthru
        _
    $region12: #{tpu_custom_call.1} parent=5 // pred_fallthru
      _
    %p124 = scmp.lt.s32.totalorder %s9, 2
    // Predicated region
    $region21: #{tpu_custom_call.1} parent=5 // pred_check
      %p125 = pneg %p124
    $region22: #{tpu_custom_call.1} parent=5 // pred_check_branch
      %127 = sbr.rel (%p125) target = $region24
    $region23: #{tpu_custom_call.1} parent=5 // pred_region
      // Predicated region
      $region25: #{tpu_custom_call.1} parent=23 // pred_check
        %p128 = pneg %p29
      $region26: #{tpu_custom_call.1} parent=23 // pred_check_branch
        %130 = sbr.rel (%p128) target = $region28
      $region27: #{tpu_custom_call.1} parent=23 // pred_region
        %s131 = smul.u32 32, %s9
        %p132 = scmp.lt.s32.totalorder %s131, 63
        %s133 = scalar_select %p132, %s131, 63
        %s134 = smul.addr %s133, 8
        %s135 = scalar_lea.vmem %s0, %s134
        %s136 = smul.u32 32, %s9
      $region28: #{tpu_custom_call.1} parent=23 // pred_fallthru
        _
    $region24: #{tpu_custom_call.1} parent=5 // pred_fallthru
      _
    %p137 = scmp.le.s32.totalorder 1, %s9
    %p138 = scmp.lt.s32.totalorder %s9, 3
    %p139 = pnand %p137, %p138
    %p140 = pneg %p139
    // Predicated region
    $region29: #{tpu_custom_call.1} parent=5 // pred_check
      _
    $region30: #{tpu_custom_call.1} parent=5 // pred_check_branch
      %142 = sbr.rel (%p139) target = $region32
    $region31: #{tpu_custom_call.1} parent=5 // pred_region
      %s143 = ssub.s32 %s9, 1
      %s144 = smul.u32 32, %s14
      %p145 = scmp.lt.s32.totalorder %s144, 63
      %s146 = scalar_select %p145, %s144, 63
      %s147 = smul.addr %s146, 8
      %s148 = scalar_lea.vmem %s0, %s147
      %p149 = pneg %p35
      %p150 = pneg %p32
      %p151 = pneg %p56
      %p152 = pneg %p53
      %p153 = pneg %p77
      %p154 = pneg %p74
      %p155 = pneg %p103
      %p156 = pneg %p100
      %s157 = smul.u32 32, %s14
      %p158 = scmp.lt.s32.totalorder %s157, 63
      %s159 = scalar_select %p158, %s157, 63
      %s160 = smul.addr %s159, 8
      %s161 = scalar_lea.vmem %s3, %s160
      %s162 = smul.u32 32, %s14
      %p163 = scmp.lt.s32.totalorder %s162, 63
      %s164 = scalar_select %p163, %s162, 63
      %s165 = smul.addr %s164, 8
      %s166 = scalar_lea.vmem %s0, %s165
      %s167 = smul.u32 32, %s14
      %s168 = smul.u32 32, %s14
      %p169 = scmp.lt.s32.totalorder %s168, 63
      %s170 = scalar_select %p169, %s168, 63
      %s171 = smul.addr %s170, 8
      %s172 = scalar_lea.vmem %s3, %s171
      %s173 = smul.u32 32, %s14
      %v174 = vld [vmem:[%s166] sm:$0xff]
      %v175 = vld [vmem:[%s166 + $0x8] sm:$0xff]
      %v176 = vld [vmem:[%s166 + $0x10] sm:$0xff]
      %v177 = vld [vmem:[%s166 + $0x18] sm:$0xff]
      %v178 = vld [vmem:[%s166 + $0x20] sm:$0xff]
      %v179 = vld [vmem:[%s166 + $0x28] sm:$0xff]
      %v180 = vld [vmem:[%s166 + $0x30] sm:$0xff]
      %v181 = vld [vmem:[%s166 + $0x38] sm:$0xff]
      %v182 = vld [vmem:[%s166 + $0x40] sm:$0xff]
      %v183 = vld [vmem:[%s166 + $0x48] sm:$0xff]
      %v184 = vld [vmem:[%s166 + $0x50] sm:$0xff]
      %v185 = vld [vmem:[%s166 + $0x58] sm:$0xff]
      %v186 = vld [vmem:[%s166 + $0x60] sm:$0xff]
      %v187 = vld [vmem:[%s166 + $0x68] sm:$0xff]
      %v188 = vld [vmem:[%s166 + $0x70] sm:$0xff]
      %v189 = vld [vmem:[%s166 + $0x78] sm:$0xff]
      %v190 = vld [vmem:[%s166 + $0x80] sm:$0xff]
      %v191 = vld [vmem:[%s166 + $0x88] sm:$0xff]
      %v192 = vld [vmem:[%s166 + $0x90] sm:$0xff]
      %v193 = vld [vmem:[%s166 + $0x98] sm:$0xff]
      %v194 = vld [vmem:[%s166 + $0xa0] sm:$0xff]
      %v195 = vld [vmem:[%s166 + $0xa8] sm:$0xff]
      %v196 = vld [vmem:[%s166 + $0xb0] sm:$0xff]
      %v197 = vld [vmem:[%s166 + $0xb8] sm:$0xff]
      %v198 = vld [vmem:[%s166 + $0xc0] sm:$0xff]
      %v199 = vld [vmem:[%s166 + $0xc8] sm:$0xff]
      %v200 = vld [vmem:[%s166 + $0xd0] sm:$0xff]
      %v201 = vld [vmem:[%s166 + $0xd8] sm:$0xff]
      %v202 = vld [vmem:[%s166 + $0xe0] sm:$0xff]
      %v203 = vld [vmem:[%s166 + $0xe8] sm:$0xff]
      %v204 = vld [vmem:[%s166 + $0xf0] sm:$0xff]
      %v205 = vld [vmem:[%s166 + $0xf8] sm:$0xff]
      %v206 = vld [vmem:[%s1] sm:$0x1]
      %v208 = vlaneseq
      %v209 = vshrl.u32 %v208, 7
      %v210 = vsub.s32 0, %v209
      %v211 = vrot.slane %v206, %v210
      %v213 = vmul.f32 %v174, %v211
      %v214 = vmul.f32 %v175, %v211
      %v215 = vmul.f32 %v176, %v211
      %v216 = vmul.f32 %v177, %v211
      %v217 = vmul.f32 %v178, %v211
      %v218 = vmul.f32 %v179, %v211
      %v219 = vmul.f32 %v180, %v211
      %v220 = vmul.f32 %v181, %v211
      %v221 = vmul.f32 %v182, %v211
      %v222 = vmul.f32 %v183, %v211
      %v223 = vmul.f32 %v184, %v211
      %v224 = vmul.f32 %v185, %v211
      %v225 = vmul.f32 %v186, %v211
      %v226 = vmul.f32 %v187, %v211
      %v227 = vmul.f32 %v188, %v211
      %v228 = vmul.f32 %v189, %v211
      %v229 = vmul.f32 %v190, %v211
      %v230 = vmul.f32 %v191, %v211
      %v231 = vmul.f32 %v192, %v211
      %v232 = vmul.f32 %v193, %v211
      %v233 = vmul.f32 %v194, %v211
      %v234 = vmul.f32 %v195, %v211
      %v235 = vmul.f32 %v196, %v211
      %v236 = vmul.f32 %v197, %v211
      %v237 = vmul.f32 %v198, %v211
      %v238 = vmul.f32 %v199, %v211
      %v239 = vmul.f32 %v200, %v211
      %v240 = vmul.f32 %v201, %v211
      %v241 = vmul.f32 %v202, %v211
      %v242 = vmul.f32 %v203, %v211
      %v243 = vmul.f32 %v204, %v211
      %v244 = vmul.f32 %v205, %v211
      %v245 = vld [vmem:[%s2] sm:$0x1]
      %v247 = vlaneseq
      %v248 = vshrl.u32 %v247, 7
      %v249 = vsub.s32 0, %v248
      %v250 = vrot.slane %v245, %v249
      %v252 = vadd.f32 %v213, %v250
      %v253 = vadd.f32 %v214, %v250
      %v254 = vadd.f32 %v215, %v250
      %v255 = vadd.f32 %v216, %v250
      %v256 = vadd.f32 %v217, %v250
      %v257 = vadd.f32 %v218, %v250
      %v258 = vadd.f32 %v219, %v250
      %v259 = vadd.f32 %v220, %v250
      %v260 = vadd.f32 %v221, %v250
      %v261 = vadd.f32 %v222, %v250
      %v262 = vadd.f32 %v223, %v250
      %v263 = vadd.f32 %v224, %v250
      %v264 = vadd.f32 %v225, %v250
      %v265 = vadd.f32 %v226, %v250
      %v266 = vadd.f32 %v227, %v250
      %v267 = vadd.f32 %v228, %v250
      %v268 = vadd.f32 %v229, %v250
      %v269 = vadd.f32 %v230, %v250
      %v270 = vadd.f32 %v231, %v250
      %v271 = vadd.f32 %v232, %v250
      %v272 = vadd.f32 %v233, %v250
      %v273 = vadd.f32 %v234, %v250
      %v274 = vadd.f32 %v235, %v250
      %v275 = vadd.f32 %v236, %v250
      %v276 = vadd.f32 %v237, %v250
      %v277 = vadd.f32 %v238, %v250
      %v278 = vadd.f32 %v239, %v250
      %v279 = vadd.f32 %v240, %v250
      %v280 = vadd.f32 %v241, %v250
      %v281 = vadd.f32 %v242, %v250
      %v282 = vadd.f32 %v243, %v250
      %v283 = vadd.f32 %v244, %v250
      %v284 = vmax.f32 %v252, 0.0
      %v285 = vmax.f32 %v253, 0.0
      %v286 = vmax.f32 %v254, 0.0
      %v287 = vmax.f32 %v255, 0.0
      %v288 = vmax.f32 %v256, 0.0
      %v289 = vmax.f32 %v257, 0.0
      %v290 = vmax.f32 %v258, 0.0
      %v291 = vmax.f32 %v259, 0.0
      %v292 = vmax.f32 %v260, 0.0
      %v293 = vmax.f32 %v261, 0.0
      %v294 = vmax.f32 %v262, 0.0
      %v295 = vmax.f32 %v263, 0.0
      %v296 = vmax.f32 %v264, 0.0
      %v297 = vmax.f32 %v265, 0.0
      %v298 = vmax.f32 %v266, 0.0
      %v299 = vmax.f32 %v267, 0.0
      %v300 = vmax.f32 %v268, 0.0
      %v301 = vmax.f32 %v269, 0.0
      %v302 = vmax.f32 %v270, 0.0
      %v303 = vmax.f32 %v271, 0.0
      %v304 = vmax.f32 %v272, 0.0
      %v305 = vmax.f32 %v273, 0.0
      %v306 = vmax.f32 %v274, 0.0
      %v307 = vmax.f32 %v275, 0.0
      %v308 = vmax.f32 %v276, 0.0
      %v309 = vmax.f32 %v277, 0.0
      %v310 = vmax.f32 %v278, 0.0
      %v311 = vmax.f32 %v279, 0.0
      %v312 = vmax.f32 %v280, 0.0
      %v313 = vmax.f32 %v281, 0.0
      %v314 = vmax.f32 %v282, 0.0
      %v315 = vmax.f32 %v283, 0.0
      %vm316 = vcmask 31744
      %317 = vst.msk [vmem:[%s172] sm:$0xff] %vm316, %v284
      %318 = vst.msk [vmem:[%s172 + $0x8] sm:$0xff] %vm316, %v285
      %319 = vst.msk [vmem:[%s172 + $0x10] sm:$0xff] %vm316, %v286
      %320 = vst.msk [vmem:[%s172 + $0x18] sm:$0xff] %vm316, %v287
      %321 = vst.msk [vmem:[%s172 + $0x20] sm:$0xff] %vm316, %v288
      %322 = vst.msk [vmem:[%s172 + $0x28] sm:$0xff] %vm316, %v289
      %323 = vst.msk [vmem:[%s172 + $0x30] sm:$0xff] %vm316, %v290
      %324 = vst.msk [vmem:[%s172 + $0x38] sm:$0xff] %vm316, %v291
      %325 = vst.msk [vmem:[%s172 + $0x40] sm:$0xff] %vm316, %v292
      %326 = vst.msk [vmem:[%s172 + $0x48] sm:$0xff] %vm316, %v293
      %327 = vst.msk [vmem:[%s172 + $0x50] sm:$0xff] %vm316, %v294
      %328 = vst.msk [vmem:[%s172 + $0x58] sm:$0xff] %vm316, %v295
      %329 = vst.msk [vmem:[%s172 + $0x60] sm:$0xff] %vm316, %v296
      %330 = vst.msk [vmem:[%s172 + $0x68] sm:$0xff] %vm316, %v297
      %331 = vst.msk [vmem:[%s172 + $0x70] sm:$0xff] %vm316, %v298
      %332 = vst.msk [vmem:[%s172 + $0x78] sm:$0xff] %vm316, %v299
      %333 = vst.msk [vmem:[%s172 + $0x80] sm:$0xff] %vm316, %v300
      %334 = vst.msk [vmem:[%s172 + $0x88] sm:$0xff] %vm316, %v301
      %335 = vst.msk [vmem:[%s172 + $0x90] sm:$0xff] %vm316, %v302
      %336 = vst.msk [vmem:[%s172 + $0x98] sm:$0xff] %vm316, %v303
      %337 = vst.msk [vmem:[%s172 + $0xa0] sm:$0xff] %vm316, %v304
      %338 = vst.msk [vmem:[%s172 + $0xa8] sm:$0xff] %vm316, %v305
      %339 = vst.msk [vmem:[%s172 + $0xb0] sm:$0xff] %vm316, %v306
      %340 = vst.msk [vmem:[%s172 + $0xb8] sm:$0xff] %vm316, %v307
      %341 = vst.msk [vmem:[%s172 + $0xc0] sm:$0xff] %vm316, %v308
      %342 = vst.msk [vmem:[%s172 + $0xc8] sm:$0xff] %vm316, %v309
      %343 = vst.msk [vmem:[%s172 + $0xd0] sm:$0xff] %vm316, %v310
      %344 = vst.msk [vmem:[%s172 + $0xd8] sm:$0xff] %vm316, %v311
      %345 = vst.msk [vmem:[%s172 + $0xe0] sm:$0xff] %vm316, %v312
      %346 = vst.msk [vmem:[%s172 + $0xe8] sm:$0xff] %vm316, %v313
      %347 = vst.msk [vmem:[%s172 + $0xf0] sm:$0xff] %vm316, %v314
      %348 = vst.msk [vmem:[%s172 + $0xf8] sm:$0xff] %vm316, %v315
      %s349 = smul.u32 32, %s14
      %p350 = scmp.lt.s32.totalorder %s349, 63
      %s351 = scalar_select %p350, %s349, 63
      %s352 = smul.addr %s351, 8
      %s353 = scalar_lea.vmem %s3, %s352
      // Predicated region
      $region33: #{tpu_custom_call.1} parent=31 // pred_check
        %p354 = pneg %p100
      $region34: #{tpu_custom_call.1} parent=31 // pred_check_branch
        %356 = sbr.rel (%p354) target = $region36
      $region35: #{tpu_custom_call.1} parent=31 // pred_region
        %s357 = smul.u32 32, %s14
      $region36: #{tpu_custom_call.1} parent=31 // pred_fallthru
        _
    $region32: #{tpu_custom_call.1} parent=5 // pred_fallthru
      _
    %p358 = scmp.le.s32.totalorder 2, %s9
    // Predicated region
    $region37: #{tpu_custom_call.1} parent=5 // pred_check
      %p359 = pneg %p358
    $region38: #{tpu_custom_call.1} parent=5 // pred_check_branch
      %361 = sbr.rel (%p359) target = $region40
    $region39: #{tpu_custom_call.1} parent=5 // pred_region
      %s362 = ssub.s32 %s9, 2
      // Predicated region
      $region41: #{tpu_custom_call.1} parent=39 // pred_check
        %p363 = pneg %p106
      $region42: #{tpu_custom_call.1} parent=39 // pred_check_branch
        %365 = sbr.rel (%p363) target = $region44
      $region43: #{tpu_custom_call.1} parent=39 // pred_region
        %s366 = smul.u32 32, %s15
        %p367 = scmp.lt.s32.totalorder %s366, 63
        %s368 = scalar_select %p367, %s366, 63
        %s369 = smul.addr %s368, 8
        %s370 = scalar_lea.vmem %s3, %s369
      $region44: #{tpu_custom_call.1} parent=39 // pred_fallthru
        _
    $region40: #{tpu_custom_call.1} parent=5 // pred_fallthru
      _
  $region6: #{tpu_custom_call.1} parent=0 // loop_footer
    %s13 = sadd.s32 1, %s9
  $region7: #{tpu_custom_call.1} parent=0 // loop_footer_branch
    %8 = sbr.rel target = $region3
  $region8: #{tpu_custom_call.1} parent=0 // loop_exit
    _

</llo_original>
